<compile_context>
chip_gen: v5e
topology: v5e:2x2
jax: 0.10.0
libtpu: 0.0.40
codegen_flags: <defaults>
</compile_context>

<pallas_src>
import jax
import jax.numpy as jnp
from jax.experimental import pallas as pl
from jax.experimental.pallas import tpu as pltpu

LATENT_DIM = 128
HIDDEN_DIM = 256
OUT_DIM = 1

# Batch-tile upper bound (rows).  4096 rows -> ~12-16 MiB peak working set
# (double-buffered z, f32 h, the (g,128,256) product temp, weights), which fits
# the 32 MiB vmem_limit_bytes below on v5e/v6e/v7x.
TILE_B_MAX = 4096


def _round_up(x, m):
    return ((x + m - 1) // m) * m


def _disc_z_kernel(z_ref, w1_ref, b1_ref, w2_ref, b2_ref, o_ref):
    tile_b = z_ref.shape[0]
    g = tile_b // 128

    # ---- Linear(128 -> 256): bf16 operands on the MXU, f32 accumulation ----
    zb = z_ref[...].astype(jnp.bfloat16)
    h = jnp.dot(zb, w1_ref[...], preferred_element_type=jnp.float32)
    h = h + b1_ref[...]

    # ---- LeakyReLU(0.2): single vmax ----------------------------------------
    h = jnp.maximum(h, 0.2 * h)

    # ---- Linear(256 -> 1), lane-dense ----------------------------------------
    # View rows as (g, 128) so the per-row reductions land lane-major: a dense
    # (g, 128) tile instead of a lane-sparse (tile_b, 1) column.
    h3 = h.reshape(g, 128, HIDDEN_DIM)
    prod = h3 * w2_ref[...].reshape(1, 1, HIDDEN_DIM)
    logits = jnp.sum(prod, axis=-1)            # (g, 128), lane-dense
    logits = logits + b2_ref[0, 0]             # scalar bias from SMEM

    # ---- Sigmoid: exp + approx reciprocal, both on the EUP (VALU stays free) -
    o_ref[...] = pl.reciprocal(1.0 + jnp.exp(-logits), approx=True).astype(
        o_ref.dtype
    )


def _choose_tiling(batch, tile_b_max):
    """Pick (tile_b, num_tiles, b_pad): tile_b is a multiple of 128 that divides
    b_pad (so padding never exceeds the next-128 round-up) and, when possible,
    the grid has >= 2 steps (both TensorCores on v7x)."""
    tile_b_max = max(128, (tile_b_max // 128) * 128)
    b_pad = _round_up(batch, 128)
    n128 = b_pad // 128
    min_tiles = max(pl.cdiv(b_pad, tile_b_max), 2 if n128 >= 2 else 1)
    num_tiles = n128
    for t in range(min_tiles, n128 + 1):
        if n128 % t == 0:
            num_tiles = t
            break
    tile_b = b_pad // num_tiles
    return tile_b, num_tiles, b_pad


def discriminator_z_forward(z, w1, b1, w2, b2, *, tile_b_max=TILE_B_MAX):
    """Pallas forward pass of DiscriminatorZ.

    z  : (B, 128) float32 (or bfloat16)
    w1 : (128, 256) float32   b1 : (1, 256) float32
    w2 : (256, 1)   float32   b2 : (1, 1)   float32
    returns (B, 1) float32
    """
    batch = z.shape[0]
    tile_b, num_tiles, b_pad = _choose_tiling(batch, tile_b_max)
    if b_pad != batch:
        # Pads only to the next multiple of 128; tile_b always divides b_pad,
        # so there is never a second, larger padding copy.
        z = jnp.pad(z, ((0, b_pad - batch), (0, 0)))

    g = tile_b // 128

    # Resident parameters: layer-1 weight in bf16 (MXU-native), layer-2 weight
    # as a lane-dense (1, 256) f32 row, bias-2 as a true scalar in SMEM.
    w1_bf16 = w1.astype(jnp.bfloat16)
    w2t = w2.reshape(1, HIDDEN_DIM).astype(jnp.float32)
    b2s = b2.reshape(1, 1).astype(jnp.float32)

    cost = pl.CostEstimate(
        flops=2 * b_pad * LATENT_DIM * HIDDEN_DIM + 2 * b_pad * HIDDEN_DIM,
        transcendentals=b_pad,
        bytes_accessed=(
            b_pad * LATENT_DIM * z.dtype.itemsize      # z read
            + b_pad * 4                                # output write
            + LATENT_DIM * HIDDEN_DIM * 2              # w1 (bf16)
            + HIDDEN_DIM * 4 * 2                       # b1 + w2
        ),
    )

    out = pl.pallas_call(
        _disc_z_kernel,
        out_shape=jax.ShapeDtypeStruct((num_tiles, g, 128), jnp.float32),
        grid=(num_tiles,),
        in_specs=[
            pl.BlockSpec((tile_b, LATENT_DIM), lambda i: (i, 0)),      # z tile
            pl.BlockSpec((LATENT_DIM, HIDDEN_DIM), lambda i: (0, 0)),  # w1 (resident)
            pl.BlockSpec((1, HIDDEN_DIM), lambda i: (0, 0)),           # b1 (resident)
            pl.BlockSpec((1, HIDDEN_DIM), lambda i: (0, 0)),           # w2t (resident)
            pl.BlockSpec(memory_space=pltpu.MemorySpace.SMEM),         # b2 scalar
        ],
        # Lane-dense output: one (g, 128) slab per grid step.
        out_specs=pl.BlockSpec((None, g, 128), lambda i: (i, 0, 0)),
        compiler_params=pltpu.CompilerParams(
            dimension_semantics=("parallel",),
            vmem_limit_bytes=32 * 1024 * 1024,
        ),
        cost_estimate=cost,
    )(z, w1_bf16, b1, w2t, b2s)

    # Row-major flatten of (num_tiles, g, 128) recovers the original row order.
    return out.reshape(b_pad, 1)[:batch]


def init_params(key):
    """Deterministic synthetic parameters (shapes from the module __init__)."""
    k1, k2, k3, k4 = jax.random.split(key, 4)
    # (in, out) layout == transpose of PyTorch's nn.Linear weight.
    w1 = jax.random.normal(k1, (LATENT_DIM, HIDDEN_DIM), jnp.float32) * 0.05
    b1 = jax.random.normal(k2, (1, HIDDEN_DIM), jnp.float32) * 0.05
    w2 = jax.random.normal(k3, (HIDDEN_DIM, OUT_DIM), jnp.float32) * 0.05
    b2 = jax.random.normal(k4, (1, OUT_DIM), jnp.float32) * 0.05
    return w1, b1, w2, b2


def reference_forward(z, w1, b1, w2, b2):
    """Pure-JAX f32 reference matching the PyTorch forward."""
    h = z @ w1 + b1
    h = jnp.where(h > 0, h, 0.2 * h)
    logits = h @ w2 + b2
    return jax.nn.sigmoid(logits)


if __name__ == "__main__":
    key = jax.random.PRNGKey(0)
    kz, kp, kz2 = jax.random.split(key, 3)
    w1, b1, w2, b2 = init_params(kp)

    # Test 1: tiny batch -> single grid step, pad-to-128 path.
    B = 8
    z = jax.random.normal(kz, (B, LATENT_DIM), jnp.float32)
    out = jax.block_until_ready(discriminator_z_forward(z, w1, b1, w2, b2))
    ref = reference_forward(z, w1, b1, w2, b2)
    assert out.shape == (B, OUT_DIM), out.shape
    err = float(jnp.max(jnp.abs(out - ref)))
    assert err < 5e-3, f"max abs err {err}"

    # Test 2: batch not a multiple of 128 -> 2 grid steps + padding path.
    B2 = 130
    z2 = jax.random.normal(kz2, (B2, LATENT_DIM), jnp.float32)
    out2 = jax.block_until_ready(discriminator_z_forward(z2, w1, b1, w2, b2))
    ref2 = reference_forward(z2, w1, b1, w2, b2)
    assert out2.shape == (B2, OUT_DIM), out2.shape
    err2 = float(jnp.max(jnp.abs(out2 - ref2)))
    assert err2 < 5e-3, f"max abs err {err2}"

    print("KERNEL_OK")
</pallas_src>

<mosaic_0001>
module attributes {stable_mosaic.version = 11 : i64} {
  func.func @_disc_z_kernel(%arg0: i32, %arg1: memref<128x128xf32, #tpu.memory_space<vmem>>, %arg2: memref<128x256xbf16, #tpu.memory_space<vmem>>, %arg3: memref<1x256xf32, #tpu.memory_space<vmem>>, %arg4: memref<1x256xf32, #tpu.memory_space<vmem>>, %arg5: memref<1x1xf32, #tpu.memory_space<smem>>, %arg6: memref<1x1x128xf32, #tpu.memory_space<vmem>>) attributes {dimension_semantics = [#tpu.dimension_semantics<parallel>], iteration_bounds = array<i64: 1>, scalar_prefetch = 0 : i64, scratch_operands = 0 : i64, tpu.core_type = #tpu.core_type<tc>, window_params = [{transform_indices = @transform_0, window_bounds = array<i64: 128, 128>}, {pipeline_mode = #tpu.pipeline_mode<synchronous>, transform_indices = @transform_1, window_bounds = array<i64: 128, 256>}, {pipeline_mode = #tpu.pipeline_mode<synchronous>, transform_indices = @transform_2, window_bounds = array<i64: 1, 256>}, {pipeline_mode = #tpu.pipeline_mode<synchronous>, transform_indices = @transform_3, window_bounds = array<i64: 1, 256>}, {transform_indices = @transform_4, window_bounds = array<i64: 1, 1>}, {transform_indices = @transform_5, window_bounds = array<i64: 1, 1, 128>}]} {
    %c0 = arith.constant 0 : index
    %c0_0 = arith.constant 0 : index
    %0 = vector.load %arg1[%c0, %c0_0] : memref<128x128xf32, #tpu.memory_space<vmem>>, vector<128x128xf32>
    %1 = arith.truncf %0 : vector<128x128xf32> to vector<128x128xbf16>
    %c0_1 = arith.constant 0 : index
    %c0_2 = arith.constant 0 : index
    %2 = vector.load %arg2[%c0_1, %c0_2] : memref<128x256xbf16, #tpu.memory_space<vmem>>, vector<128x256xbf16>
    %cst = arith.constant dense<0.000000e+00> : vector<128x256xf32>
    %3 = tpu.matmul %1, %2, %cst {dimension_numbers = #tpu.dot_dimension_numbers<[1], [0], [0], [1], [0, 0, 1, 1], [], []>} : vector<128x128xbf16>, vector<128x256xbf16>, vector<128x256xf32> -> vector<128x256xf32>
    %c0_3 = arith.constant 0 : index
    %c0_4 = arith.constant 0 : index
    %4 = vector.load %arg3[%c0_3, %c0_4] : memref<1x256xf32, #tpu.memory_space<vmem>>, vector<1x256xf32>
    %5 = vector.broadcast %4 : vector<1x256xf32> to vector<128x256xf32>
    %6 = arith.addf %3, %5 : vector<128x256xf32>
    %cst_5 = arith.constant 2.000000e-01 : f32
    %7 = vector.broadcast %cst_5 : f32 to vector<128x256xf32>
    %8 = arith.mulf %7, %6 : vector<128x256xf32>
    %9 = arith.maximumf %6, %8 : vector<128x256xf32>
    %10 = vector.shape_cast %9 : vector<128x256xf32> to vector<1x128x256xf32>
    %c0_6 = arith.constant 0 : index
    %c0_7 = arith.constant 0 : index
    %11 = vector.load %arg4[%c0_6, %c0_7] : memref<1x256xf32, #tpu.memory_space<vmem>>, vector<1x256xf32>
    %12 = vector.shape_cast %11 : vector<1x256xf32> to vector<1x1x256xf32>
    %13 = vector.broadcast %12 : vector<1x1x256xf32> to vector<1x128x256xf32>
    %14 = arith.mulf %10, %13 : vector<1x128x256xf32>
    %cst_8 = arith.constant dense<0.000000e+00> : vector<1x128xf32>
    %15 = vector.multi_reduction <add>, %14, %cst_8 [2] : vector<1x128x256xf32> to vector<1x128xf32>
    %c0_9 = arith.constant 0 : index
    %c0_10 = arith.constant 0 : index
    %16 = memref.load %arg5[%c0_9, %c0_10] : memref<1x1xf32, #tpu.memory_space<smem>>
    %17 = vector.broadcast %16 : f32 to vector<1x128xf32>
    %18 = arith.addf %15, %17 : vector<1x128xf32>
    %cst_11 = arith.constant 0.000000e+00 : f32
    %19 = vector.broadcast %cst_11 : f32 to vector<1x128xf32>
    %20 = arith.subf %19, %18 : vector<1x128xf32>
    %21 = math.exp %20 : vector<1x128xf32>
    %cst_12 = arith.constant 1.000000e+00 : f32
    %22 = vector.broadcast %cst_12 : f32 to vector<1x128xf32>
    %23 = arith.addf %22, %21 : vector<1x128xf32>
    %24 = tpu.reciprocal %23 {approx = true} : vector<1x128xf32> -> vector<1x128xf32>
    %c0_13 = arith.constant 0 : index
    %c0_14 = arith.constant 0 : index
    %c0_15 = arith.constant 0 : index
    %25 = vector.load %arg6[%c0_13, %c0_14, %c0_15] : memref<1x1x128xf32, #tpu.memory_space<vmem>>, vector<1x1x128xf32>
    %26 = vector.shape_cast %25 : vector<1x1x128xf32> to vector<1x128xf32>
    %27 = vector.shape_cast %24 : vector<1x128xf32> to vector<1x1x128xf32>
    tpu.vector_store %arg6[%c0_13, %c0_14, %c0_15], %27 {strides = array<i32>} : memref<1x1x128xf32, #tpu.memory_space<vmem>>, vector<1x1x128xf32>,
    return
  }
  func.func @transform_0(%arg0: i32) -> (i32, i32) {
    %c0_i32 = arith.constant 0 : i32
    %c0_i32_0 = arith.constant 0 : i32
    return %arg0, %c0_i32 : i32, i32
  }
  func.func @transform_1(%arg0: i32) -> (i32, i32) {
    %c0_i32 = arith.constant 0 : i32
    %c0_i32_0 = arith.constant 0 : i32
    %c0_i32_1 = arith.constant 0 : i32
    return %c0_i32, %c0_i32_0 : i32, i32
  }
  func.func @transform_2(%arg0: i32) -> (i32, i32) {
    %c0_i32 = arith.constant 0 : i32
    %c0_i32_0 = arith.constant 0 : i32
    %c0_i32_1 = arith.constant 0 : i32
    return %c0_i32, %c0_i32_0 : i32, i32
  }
  func.func @transform_3(%arg0: i32) -> (i32, i32) {
    %c0_i32 = arith.constant 0 : i32
    %c0_i32_0 = arith.constant 0 : i32
    %c0_i32_1 = arith.constant 0 : i32
    return %c0_i32, %c0_i32_0 : i32, i32
  }
  func.func @transform_4(%arg0: i32) -> (i32, i32) {
    %c0_i32 = arith.constant 0 : i32
    %c0_i32_0 = arith.constant 0 : i32
    %c0_i32_1 = arith.constant 0 : i32
    return %c0_i32, %c0_i32_0 : i32, i32
  }
  func.func @transform_5(%arg0: i32) -> (i32, i32, i32) {
    %c0_i32 = arith.constant 0 : i32
    %c0_i32_0 = arith.constant 0 : i32
    %c0_i32_1 = arith.constant 0 : i32
    return %arg0, %c0_i32, %c0_i32_0 : i32, i32, i32
  }
}

</mosaic_0001>

<llo_original>
// kernel: tpu_custom_call.1
$region0: #{tpu_custom_call.1}
  #allocation0 [shape = 'u32[]', space=smem, size = 0x4, offset = 0x4, fixed_abs, tag = 'smem constant byte address 0x4 - core index']
  #allocation1 [shape = 'u32[72,128]{1,0:T(1,128)}', space=vmem, size = 0x9000, scoped, tag = 'internal scratch']
  #allocation2 [shape = 'f32[1,1]{1,0:T(1,128)S(6)}', space=smem, size = 0x200, scoped, tag = 'scoped memory for tpu_custom_call.1']
  %s0 = inlined_call_operand.hbm [shape: f32[128,128], index: 0, kind: input, shape index: {}]
  %s1 = inlined_call_operand.hbm [shape: bf16[128,256], index: 1, kind: input, shape index: {}]
  %s2 = inlined_call_operand.vmem [shape: f32[1,256], index: 2, kind: input, shape index: {}]
  %s3 = inlined_call_operand.vmem [shape: f32[1,256], index: 3, kind: input, shape index: {}]
  %s4 = inlined_call_operand.<no memory space> [shape: f32[1,1], index: 4, kind: input, shape index: {}]
  %s5 = inlined_call_operand.hbm [shape: f32[1,1,128], index: 5, kind: output, shape index: {}]
  %s6 = sld [smem:[#allocation0]]
  $region38: #{tpu_custom_call.1} parent=0
    _
  %s8 = ssub.s32 1, %s6
  %s9 = scalar_select 0, %s8, %s6
  %10 = sst [smem:[#allocation2]] %s4
  $region1: #{tpu_custom_call.1} parent=0
    #allocation3 [shape = 'u8[65536]{0}', space=vmem, size = 0x10000, scoped, tag = 'input window, operand 0, single buffered']
    #allocation4 [shape = 's32[1]{0}', space=sflag, size = 0x4, scoped, tag = 'scoped memory for tpu_custom_call.1']
    #allocation5 [shape = 's32[1]{0}', space=sflag, size = 0x4, scoped, tag = 'scoped memory for tpu_custom_call.1']
    #allocation6 [shape = 'u8[65536]{0}', space=vmem, size = 0x10000, scoped, tag = 'input window, operand 1, single buffered']
    #allocation7 [shape = 's32[1]{0}', space=sflag, size = 0x4, scoped, tag = 'scoped memory for tpu_custom_call.1']
    #allocation8 [shape = 'u8[512]{0}', space=vmem, size = 0x400, scoped, tag = 'output window, operand 0, single buffered']
    %11 = vsyncpa [#allocation4], 0
    %12 = vsyncpa [#allocation7], 0
    %13 = vsyncpa [#allocation5], 0
    // Predicated region
    $region2: #{tpu_custom_call.1} parent=1 // pred_check
      _
    $region3: #{tpu_custom_call.1} parent=1 // pred_check_branch
      %15 = sbr.rel (0) target = $region5
    $region4: #{tpu_custom_call.1} parent=1 // pred_region
      %17 = vsyncadd [#allocation4], 0
      %s18 = sshll.u32 %s0, 4
      %s19 = int_to_ptr.hbm [resolvable:$true] %s18
      %s20 = sshll.u32 [#allocation3], 4
      %s21 = int_to_ptr.vmem [resolvable:$true] %s20
      %26 = dma.hbm_to_vmem [thread:$0]  %s19, 2048, %s21, [#allocation4], 128, 128, 8
    $region5: #{tpu_custom_call.1} parent=1 // pred_fallthru
      _
    // Predicated region
    $region6: #{tpu_custom_call.1} parent=1 // pred_check
      _
    $region7: #{tpu_custom_call.1} parent=1 // pred_check_branch
      %28 = sbr.rel (0) target = $region9
    $region8: #{tpu_custom_call.1} parent=1 // pred_region
      %30 = vsyncadd [#allocation7], 0
      %s31 = sshll.u32 %s1, 4
      %s32 = int_to_ptr.hbm [resolvable:$true] %s31
      %s33 = sshll.u32 [#allocation6], 4
      %s34 = int_to_ptr.vmem [resolvable:$true] %s33
      %39 = dma.hbm_to_vmem [thread:$0]  %s32, 2048, %s34, [#allocation7], 128, 128, 8
    $region9: #{tpu_custom_call.1} parent=1 // pred_fallthru
      _
    // Predicated region
    $region10: #{tpu_custom_call.1} parent=1 // pred_check
      _
    $region11: #{tpu_custom_call.1} parent=1 // pred_check_branch
      %41 = sbr.rel (0) target = $region13
    $region12: #{tpu_custom_call.1} parent=1 // pred_region
      _
    $region13: #{tpu_custom_call.1} parent=1 // pred_fallthru
      _
    // Predicated region
    $region14: #{tpu_custom_call.1} parent=1 // pred_check
      _
    $region15: #{tpu_custom_call.1} parent=1 // pred_check_branch
      %43 = sbr.rel (0) target = $region17
    $region16: #{tpu_custom_call.1} parent=1 // pred_region
      _
    $region17: #{tpu_custom_call.1} parent=1 // pred_fallthru
      _
    // Predicated region
    $region18: #{tpu_custom_call.1} parent=1 // pred_check
      _
    $region19: #{tpu_custom_call.1} parent=1 // pred_check_branch
      %45 = sbr.rel (0) target = $region21
    $region20: #{tpu_custom_call.1} parent=1 // pred_region
      _
    $region21: #{tpu_custom_call.1} parent=1 // pred_fallthru
      _
    // Predicated region
    $region22: #{tpu_custom_call.1} parent=1 // pred_check
      _
    $region23: #{tpu_custom_call.1} parent=1 // pred_check_branch
      %47 = sbr.rel (0) target = $region25
    $region24: #{tpu_custom_call.1} parent=1 // pred_region
      %49 = dma.done [#allocation4], 2048
    $region25: #{tpu_custom_call.1} parent=1 // pred_fallthru
      _
    // Predicated region
    $region26: #{tpu_custom_call.1} parent=1 // pred_check
      _
    $region27: #{tpu_custom_call.1} parent=1 // pred_check_branch
      %51 = sbr.rel (0) target = $region29
    $region28: #{tpu_custom_call.1} parent=1 // pred_region
      %53 = dma.done [#allocation7], 2048
    $region29: #{tpu_custom_call.1} parent=1 // pred_fallthru
      _
    %v54 = vld [vmem:[#allocation3] sm:$0xff]
    %v55 = vld [vmem:[#allocation3 + $0x8] sm:$0xff]
    %v56 = vld [vmem:[#allocation3 + $0x10] sm:$0xff]
    %v57 = vld [vmem:[#allocation3 + $0x18] sm:$0xff]
    %v58 = vld [vmem:[#allocation3 + $0x20] sm:$0xff]
    %v59 = vld [vmem:[#allocation3 + $0x28] sm:$0xff]
    %v60 = vld [vmem:[#allocation3 + $0x30] sm:$0xff]
    %v61 = vld [vmem:[#allocation3 + $0x38] sm:$0xff]
    %v62 = vld [vmem:[#allocation3 + $0x40] sm:$0xff]
    %v63 = vld [vmem:[#allocation3 + $0x48] sm:$0xff]
    %v64 = vld [vmem:[#allocation3 + $0x50] sm:$0xff]
    %v65 = vld [vmem:[#allocation3 + $0x58] sm:$0xff]
    %v66 = vld [vmem:[#allocation3 + $0x60] sm:$0xff]
    %v67 = vld [vmem:[#allocation3 + $0x68] sm:$0xff]
    %v68 = vld [vmem:[#allocation3 + $0x70] sm:$0xff]
    %v69 = vld [vmem:[#allocation3 + $0x78] sm:$0xff]
    %v70 = vpack.c.bf16 %v55, %v54
    %v71 = vpack.c.bf16 %v57, %v56
    %v72 = vpack.c.bf16 %v59, %v58
    %v73 = vpack.c.bf16 %v61, %v60
    %v74 = vpack.c.bf16 %v63, %v62
    %v75 = vpack.c.bf16 %v65, %v64
    %v76 = vpack.c.bf16 %v67, %v66
    %v77 = vpack.c.bf16 %v69, %v68
    %v78 = vld [vmem:[#allocation6] sm:$0xff]
    %v79 = vld [vmem:[#allocation6 + $0x8] sm:$0xff]
    %v80 = vld [vmem:[#allocation6 + $0x10] sm:$0xff]
    %v81 = vld [vmem:[#allocation6 + $0x18] sm:$0xff]
    %v82 = vld [vmem:[#allocation6 + $0x20] sm:$0xff]
    %v83 = vld [vmem:[#allocation6 + $0x28] sm:$0xff]
    %v84 = vld [vmem:[#allocation6 + $0x30] sm:$0xff]
    %v85 = vld [vmem:[#allocation6 + $0x38] sm:$0xff]
    %v86 = vld [vmem:[#allocation6 + $0x40] sm:$0xff]
    %v87 = vld [vmem:[#allocation6 + $0x48] sm:$0xff]
    %v88 = vld [vmem:[#allocation6 + $0x50] sm:$0xff]
    %v89 = vld [vmem:[#allocation6 + $0x58] sm:$0xff]
    %v90 = vld [vmem:[#allocation6 + $0x60] sm:$0xff]
    %v91 = vld [vmem:[#allocation6 + $0x68] sm:$0xff]
    %v92 = vld [vmem:[#allocation6 + $0x70] sm:$0xff]
    %v93 = vld [vmem:[#allocation6 + $0x78] sm:$0xff]
    %v94 = vld [vmem:[%s2] sm:$0x3]
    %v96 = vperm.slane %v94, 0
    %v97 = vperm.slane %v94, 1
    %v116 = vunpack.c.l.b16 %v78
    %v117 = vunpack.c.h.b16 %v78
    %v118 = vunpack.c.l.b16 %v79
    %v119 = vunpack.c.h.b16 %v79
    %v120 = vunpack.c.l.b16 %v80
    %v121 = vunpack.c.h.b16 %v80
    %v122 = vunpack.c.l.b16 %v81
    %v123 = vunpack.c.h.b16 %v81
    %v124 = vunpack.c.l.b16 %v82
    %v125 = vunpack.c.h.b16 %v82
    %v126 = vunpack.c.l.b16 %v83
    %v127 = vunpack.c.h.b16 %v83
    %v128 = vunpack.c.l.b16 %v84
    %v129 = vunpack.c.h.b16 %v84
    %v130 = vunpack.c.l.b16 %v85
    %v131 = vunpack.c.h.b16 %v85
    %v132 = vunpack.c.l.b16 %v86
    %v133 = vunpack.c.h.b16 %v86
    %v134 = vunpack.c.l.b16 %v87
    %v135 = vunpack.c.h.b16 %v87
    %v136 = vunpack.c.l.b16 %v88
    %v137 = vunpack.c.h.b16 %v88
    %v138 = vunpack.c.l.b16 %v89
    %v139 = vunpack.c.h.b16 %v89
    %v140 = vunpack.c.l.b16 %v90
    %v141 = vunpack.c.h.b16 %v90
    %v142 = vunpack.c.l.b16 %v91
    %v143 = vunpack.c.h.b16 %v91
    %v144 = vunpack.c.l.b16 %v92
    %v145 = vunpack.c.h.b16 %v92
    %v146 = vunpack.c.l.b16 %v93
    %v147 = vunpack.c.h.b16 %v93
    %v148 = vpack.c.b16 %v118, %v116
    %v149 = vpack.c.b16 %v119, %v117
    %v150 = vpack.c.b16 %v122, %v120
    %v151 = vpack.c.b16 %v123, %v121
    %v152 = vpack.c.b16 %v126, %v124
    %v153 = vpack.c.b16 %v127, %v125
    %v154 = vpack.c.b16 %v130, %v128
    %v155 = vpack.c.b16 %v131, %v129
    %v156 = vpack.c.b16 %v134, %v132
    %v157 = vpack.c.b16 %v135, %v133
    %v158 = vpack.c.b16 %v138, %v136
    %v159 = vpack.c.b16 %v139, %v137
    %v160 = vpack.c.b16 %v142, %v140
    %v161 = vpack.c.b16 %v143, %v141
    %v162 = vpack.c.b16 %v146, %v144
    %v163 = vpack.c.b16 %v147, %v145
    %180 = vmatpush.bf16.msra.mxu0 %v162
    %181 = vmatpush.bf16.msra.mxu0 %v160
    %182 = vmatpush.bf16.msra.mxu0 %v158
    %183 = vmatpush.bf16.msra.mxu0 %v156
    %184 = vmatpush.bf16.msra.mxu0 %v154
    %185 = vmatpush.bf16.msra.mxu0 %v152
    %186 = vmatpush.bf16.msra.mxu0 %v150
    %187 = vmatpush.bf16.msra.mxu0 %v148
    %188 = vmatmul.bf16.gmra.mxu0 %v70
    %v189 = vpop.f32.mrf.mxu0
    %v190 = vadd.f32 %v96, %v189
    %v191 = vpop.f32.mrf.mxu0
    %v192 = vadd.f32 %v96, %v191
    %193 = vmatmul.bf16.gmra.mxu0 %v71
    %v194 = vpop.f32.mrf.mxu0
    %v195 = vadd.f32 %v96, %v194
    %v196 = vpop.f32.mrf.mxu0
    %v197 = vadd.f32 %v96, %v196
    %198 = vmatmul.bf16.gmra.mxu0 %v72
    %v199 = vpop.f32.mrf.mxu0
    %v200 = vadd.f32 %v96, %v199
    %v201 = vpop.f32.mrf.mxu0
    %v202 = vadd.f32 %v96, %v201
    %203 = vmatmul.bf16.gmra.mxu0 %v73
    %v204 = vpop.f32.mrf.mxu0
    %v205 = vadd.f32 %v96, %v204
    %v206 = vpop.f32.mrf.mxu0
    %v207 = vadd.f32 %v96, %v206
    %208 = vmatmul.bf16.gmra.mxu0 %v74
    %v209 = vpop.f32.mrf.mxu0
    %v210 = vadd.f32 %v96, %v209
    %v211 = vpop.f32.mrf.mxu0
    %v212 = vadd.f32 %v96, %v211
    %213 = vmatmul.bf16.gmra.mxu0 %v75
    %v214 = vpop.f32.mrf.mxu0
    %v215 = vadd.f32 %v96, %v214
    %v216 = vpop.f32.mrf.mxu0
    %v217 = vadd.f32 %v96, %v216
    %218 = vmatmul.bf16.gmra.mxu0 %v76
    %v219 = vpop.f32.mrf.mxu0
    %v220 = vadd.f32 %v96, %v219
    %v221 = vpop.f32.mrf.mxu0
    %v222 = vadd.f32 %v96, %v221
    %223 = vmatmul.bf16.gmra.mxu0 %v77
    %v224 = vpop.f32.mrf.mxu0
    %v225 = vadd.f32 %v96, %v224
    %v226 = vpop.f32.mrf.mxu0
    %v227 = vadd.f32 %v96, %v226
    %228 = vdwg.mxu0
    %229 = vmatpush.bf16.msra.mxu0 %v163
    %230 = vmatpush.bf16.msra.mxu0 %v161
    %231 = vmatpush.bf16.msra.mxu0 %v159
    %232 = vmatpush.bf16.msra.mxu0 %v157
    %233 = vmatpush.bf16.msra.mxu0 %v155
    %234 = vmatpush.bf16.msra.mxu0 %v153
    %235 = vmatpush.bf16.msra.mxu0 %v151
    %236 = vmatpush.bf16.msra.mxu0 %v149
    %237 = vmatmul.bf16.gmra.mxu0 %v70
    %v238 = vpop.f32.mrf.mxu0
    %v239 = vadd.f32 %v97, %v238
    %v240 = vpop.f32.mrf.mxu0
    %v241 = vadd.f32 %v97, %v240
    %242 = vmatmul.bf16.gmra.mxu0 %v71
    %v243 = vpop.f32.mrf.mxu0
    %v244 = vadd.f32 %v97, %v243
    %v245 = vpop.f32.mrf.mxu0
    %v246 = vadd.f32 %v97, %v245
    %247 = vmatmul.bf16.gmra.mxu0 %v72
    %v248 = vpop.f32.mrf.mxu0
    %v249 = vadd.f32 %v97, %v248
    %v250 = vpop.f32.mrf.mxu0
    %v251 = vadd.f32 %v97, %v250
    %252 = vmatmul.bf16.gmra.mxu0 %v73
    %v253 = vpop.f32.mrf.mxu0
    %v254 = vadd.f32 %v97, %v253
    %v255 = vpop.f32.mrf.mxu0
    %v256 = vadd.f32 %v97, %v255
    %257 = vmatmul.bf16.gmra.mxu0 %v74
    %v258 = vpop.f32.mrf.mxu0
    %v259 = vadd.f32 %v97, %v258
    %v260 = vpop.f32.mrf.mxu0
    %v261 = vadd.f32 %v97, %v260
    %262 = vmatmul.bf16.gmra.mxu0 %v75
    %v263 = vpop.f32.mrf.mxu0
    %v264 = vadd.f32 %v97, %v263
    %v265 = vpop.f32.mrf.mxu0
    %v266 = vadd.f32 %v97, %v265
    %267 = vmatmul.bf16.gmra.mxu0 %v76
    %v268 = vpop.f32.mrf.mxu0
    %v269 = vadd.f32 %v97, %v268
    %v270 = vpop.f32.mrf.mxu0
    %v271 = vadd.f32 %v97, %v270
    %272 = vmatmul.bf16.gmra.mxu0 %v77
    %v273 = vpop.f32.mrf.mxu0
    %v274 = vadd.f32 %v97, %v273
    %v275 = vpop.f32.mrf.mxu0
    %v276 = vadd.f32 %v97, %v275
    %277 = vdwg.mxu0
    %v278 = vmul.f32 %v190, 0.2
    %v279 = vmul.f32 %v239, 0.2
    %v280 = vmul.f32 %v192, 0.2
    %v281 = vmul.f32 %v241, 0.2
    %v282 = vmul.f32 %v195, 0.2
    %v283 = vmul.f32 %v244, 0.2
    %v284 = vmul.f32 %v197, 0.2
    %v285 = vmul.f32 %v246, 0.2
    %v286 = vmul.f32 %v200, 0.2
    %v287 = vmul.f32 %v249, 0.2
    %v288 = vmul.f32 %v202, 0.2
    %v289 = vmul.f32 %v251, 0.2
    %v290 = vmul.f32 %v205, 0.2
    %v291 = vmul.f32 %v254, 0.2
    %v292 = vmul.f32 %v207, 0.2
    %v293 = vmul.f32 %v256, 0.2
    %v294 = vmul.f32 %v210, 0.2
    %v295 = vmul.f32 %v259, 0.2
    %v296 = vmul.f32 %v212, 0.2
    %v297 = vmul.f32 %v261, 0.2
    %v298 = vmul.f32 %v215, 0.2
    %v299 = vmul.f32 %v264, 0.2
    %v300 = vmul.f32 %v217, 0.2
    %v301 = vmul.f32 %v266, 0.2
    %v302 = vmul.f32 %v220, 0.2
    %v303 = vmul.f32 %v269, 0.2
    %v304 = vmul.f32 %v222, 0.2
    %v305 = vmul.f32 %v271, 0.2
    %v306 = vmul.f32 %v225, 0.2
    %v307 = vmul.f32 %v274, 0.2
    %v308 = vmul.f32 %v227, 0.2
    %v309 = vmul.f32 %v276, 0.2
    %v310 = vmax.f32 %v190, %v278
    %v311 = vmax.f32 %v239, %v279
    %v312 = vmax.f32 %v192, %v280
    %v313 = vmax.f32 %v241, %v281
    %v314 = vmax.f32 %v195, %v282
    %v315 = vmax.f32 %v244, %v283
    %v316 = vmax.f32 %v197, %v284
    %v317 = vmax.f32 %v246, %v285
    %v318 = vmax.f32 %v200, %v286
    %v319 = vmax.f32 %v249, %v287
    %v320 = vmax.f32 %v202, %v288
    %v321 = vmax.f32 %v251, %v289
    %v322 = vmax.f32 %v205, %v290
    %v323 = vmax.f32 %v254, %v291
    %v324 = vmax.f32 %v207, %v292
    %v325 = vmax.f32 %v256, %v293
    %v326 = vmax.f32 %v210, %v294
    %v327 = vmax.f32 %v259, %v295
    %v328 = vmax.f32 %v212, %v296
    %v329 = vmax.f32 %v261, %v297
    %v330 = vmax.f32 %v215, %v298
    %v331 = vmax.f32 %v264, %v299
    %v332 = vmax.f32 %v217, %v300
    %v333 = vmax.f32 %v266, %v301
    %v334 = vmax.f32 %v220, %v302
    %v335 = vmax.f32 %v269, %v303
    %v336 = vmax.f32 %v222, %v304
    %v337 = vmax.f32 %v271, %v305
    %v338 = vmax.f32 %v225, %v306
    %v339 = vmax.f32 %v274, %v307
    %v340 = vmax.f32 %v227, %v308
    %v341 = vmax.f32 %v276, %v309
    %v342 = vld [vmem:[%s3] sm:$0x3]
    %v344 = vperm.slane %v342, 0
    %v345 = vperm.slane %v342, 1
    %v348 = vmul.f32 %v310, %v344
    %v349 = vmul.f32 %v311, %v345
    %v350 = vmul.f32 %v312, %v344
    %v351 = vmul.f32 %v313, %v345
    %v352 = vmul.f32 %v314, %v344
    %v353 = vmul.f32 %v315, %v345
    %v354 = vmul.f32 %v316, %v344
    %v355 = vmul.f32 %v317, %v345
    %v356 = vmul.f32 %v318, %v344
    %v357 = vmul.f32 %v319, %v345
    %v358 = vmul.f32 %v320, %v344
    %v359 = vmul.f32 %v321, %v345
    %v360 = vmul.f32 %v322, %v344
    %v361 = vmul.f32 %v323, %v345
    %v362 = vmul.f32 %v324, %v344
    %v363 = vmul.f32 %v325, %v345
    %v364 = vmul.f32 %v326, %v344
    %v365 = vmul.f32 %v327, %v345
    %v366 = vmul.f32 %v328, %v344
    %v367 = vmul.f32 %v329, %v345
    %v368 = vmul.f32 %v330, %v344
    %v369 = vmul.f32 %v331, %v345
    %v370 = vmul.f32 %v332, %v344
    %v371 = vmul.f32 %v333, %v345
    %v372 = vmul.f32 %v334, %v344
    %v373 = vmul.f32 %v335, %v345
    %v374 = vmul.f32 %v336, %v344
    %v375 = vmul.f32 %v337, %v345
    %v376 = vmul.f32 %v338, %v344
    %v377 = vmul.f32 %v339, %v345
    %v378 = vmul.f32 %v340, %v344
    %v379 = vmul.f32 %v341, %v345
    %v380 = vadd.f32 %v348, %v349
    %381 = vadd.xlane.f32.xlu0 %v380
    %v382 = vpop.xlane.xlu0 %381
    %v383 = vadd.f32 %v350, %v351
    %384 = vadd.xlane.f32.xlu0 %v383
    %v385 = vpop.xlane.xlu0 %384
    %v386 = vadd.f32 %v352, %v353
    %387 = vadd.xlane.f32.xlu0 %v386
    %v388 = vpop.xlane.xlu0 %387
    %v389 = vadd.f32 %v354, %v355
    %390 = vadd.xlane.f32.xlu0 %v389
    %v391 = vpop.xlane.xlu0 %390
    %v392 = vadd.f32 %v356, %v357
    %393 = vadd.xlane.f32.xlu0 %v392
    %v394 = vpop.xlane.xlu0 %393
    %v395 = vadd.f32 %v358, %v359
    %396 = vadd.xlane.f32.xlu0 %v395
    %v397 = vpop.xlane.xlu0 %396
    %v398 = vadd.f32 %v360, %v361
    %399 = vadd.xlane.f32.xlu0 %v398
    %v400 = vpop.xlane.xlu0 %399
    %v401 = vadd.f32 %v362, %v363
    %402 = vadd.xlane.f32.xlu0 %v401
    %v403 = vpop.xlane.xlu0 %402
    %v404 = vadd.f32 %v364, %v365
    %405 = vadd.xlane.f32.xlu0 %v404
    %v406 = vpop.xlane.xlu0 %405
    %v407 = vadd.f32 %v366, %v367
    %408 = vadd.xlane.f32.xlu0 %v407
    %v409 = vpop.xlane.xlu0 %408
    %v410 = vadd.f32 %v368, %v369
    %411 = vadd.xlane.f32.xlu0 %v410
    %v412 = vpop.xlane.xlu0 %411
    %v413 = vadd.f32 %v370, %v371
    %414 = vadd.xlane.f32.xlu0 %v413
    %v415 = vpop.xlane.xlu0 %414
    %v416 = vadd.f32 %v372, %v373
    %417 = vadd.xlane.f32.xlu0 %v416
    %v418 = vpop.xlane.xlu0 %417
    %v419 = vadd.f32 %v374, %v375
    %420 = vadd.xlane.f32.xlu0 %v419
    %v421 = vpop.xlane.xlu0 %420
    %v422 = vadd.f32 %v376, %v377
    %423 = vadd.xlane.f32.xlu0 %v422
    %v424 = vpop.xlane.xlu0 %423
    %v425 = vadd.f32 %v378, %v379
    %426 = vadd.xlane.f32.xlu0 %v425
    %v427 = vpop.xlane.xlu0 %426
    %s428 = sld [smem:[#allocation2]]
    %v429 = vstv %s428
    %v430 = vadd.f32 %v382, %v429
    %v431 = vadd.f32 %v385, %v429
    %v432 = vadd.f32 %v388, %v429
    %v433 = vadd.f32 %v391, %v429
    %v434 = vadd.f32 %v394, %v429
    %v435 = vadd.f32 %v397, %v429
    %v436 = vadd.f32 %v400, %v429
    %v437 = vadd.f32 %v403, %v429
    %v438 = vadd.f32 %v406, %v429
    %v439 = vadd.f32 %v409, %v429
    %v440 = vadd.f32 %v412, %v429
    %v441 = vadd.f32 %v415, %v429
    %v442 = vadd.f32 %v418, %v429
    %v443 = vadd.f32 %v421, %v429
    %v444 = vadd.f32 %v424, %v429
    %v445 = vadd.f32 %v427, %v429
    %v446 = vsub.f32 0.0, %v430
    %v447 = vsub.f32 0.0, %v431
    %v448 = vsub.f32 0.0, %v432
    %v449 = vsub.f32 0.0, %v433
    %v450 = vsub.f32 0.0, %v434
    %v451 = vsub.f32 0.0, %v435
    %v452 = vsub.f32 0.0, %v436
    %v453 = vsub.f32 0.0, %v437
    %v454 = vsub.f32 0.0, %v438
    %v455 = vsub.f32 0.0, %v439
    %v456 = vsub.f32 0.0, %v440
    %v457 = vsub.f32 0.0, %v441
    %v458 = vsub.f32 0.0, %v442
    %v459 = vsub.f32 0.0, %v443
    %v460 = vsub.f32 0.0, %v444
    %v461 = vsub.f32 0.0, %v445
    %v462 = vmul.f32 %v446, 1.442695
    %v463 = vpow.pop %v462
    %v464 = vmul.f32 %v447, 1.442695
    %v465 = vpow.pop %v464
    %v466 = vmul.f32 %v448, 1.442695
    %v467 = vpow.pop %v466
    %v468 = vmul.f32 %v449, 1.442695
    %v469 = vpow.pop %v468
    %v470 = vmul.f32 %v450, 1.442695
    %v471 = vpow.pop %v470
    %v472 = vmul.f32 %v451, 1.442695
    %v473 = vpow.pop %v472
    %v474 = vmul.f32 %v452, 1.442695
    %v475 = vpow.pop %v474
    %v476 = vmul.f32 %v453, 1.442695
    %v477 = vpow.pop %v476
    %v478 = vmul.f32 %v454, 1.442695
    %v479 = vpow.pop %v478
    %v480 = vmul.f32 %v455, 1.442695
    %v481 = vpow.pop %v480
    %v482 = vmul.f32 %v456, 1.442695
    %v483 = vpow.pop %v482
    %v484 = vmul.f32 %v457, 1.442695
    %v485 = vpow.pop %v484
    %v486 = vmul.f32 %v458, 1.442695
    %v487 = vpow.pop %v486
    %v488 = vmul.f32 %v459, 1.442695
    %v489 = vpow.pop %v488
    %v490 = vmul.f32 %v460, 1.442695
    %v491 = vpow.pop %v490
    %v492 = vmul.f32 %v461, 1.442695
    %v493 = vpow.pop %v492
    %v494 = vadd.f32 %v463, 1.0
    %v495 = vadd.f32 %v465, 1.0
    %v496 = vadd.f32 %v467, 1.0
    %v497 = vadd.f32 %v469, 1.0
    %v498 = vadd.f32 %v471, 1.0
    %v499 = vadd.f32 %v473, 1.0
    %v500 = vadd.f32 %v475, 1.0
    %v501 = vadd.f32 %v477, 1.0
    %v502 = vadd.f32 %v479, 1.0
    %v503 = vadd.f32 %v481, 1.0
    %v504 = vadd.f32 %v483, 1.0
    %v505 = vadd.f32 %v485, 1.0
    %v506 = vadd.f32 %v487, 1.0
    %v507 = vadd.f32 %v489, 1.0
    %v508 = vadd.f32 %v491, 1.0
    %v509 = vadd.f32 %v493, 1.0
    %v510 = vrcp.pop %v494
    %v511 = vrcp.pop %v495
    %v512 = vrcp.pop %v496
    %v513 = vrcp.pop %v497
    %v514 = vrcp.pop %v498
    %v515 = vrcp.pop %v499
    %v516 = vrcp.pop %v500
    %v517 = vrcp.pop %v501
    %v518 = vrcp.pop %v502
    %v519 = vrcp.pop %v503
    %v520 = vrcp.pop %v504
    %v521 = vrcp.pop %v505
    %v522 = vrcp.pop %v506
    %v523 = vrcp.pop %v507
    %v524 = vrcp.pop %v508
    %v525 = vrcp.pop %v509
    %v542 = vlaneseq
    %v543 = vand.u32 %v542, 127
    %v544 = vperm.slane %v510, %v543
    %v545 = vadd.s32 %v543, 4294967288
    %v546 = vperm.slane %v511, %v545
    %vm547 = vcmask 130112
    %v548 = vsel %vm547, %v546, %v544
    %v549 = vadd.s32 %v543, 4294967280
    %v550 = vperm.slane %v512, %v549
    %vm551 = vcmask 195712
    %v552 = vsel %vm551, %v550, %v548
    %v553 = vadd.s32 %v543, 4294967272
    %v554 = vperm.slane %v513, %v553
    %vm555 = vcmask 261312
    %v556 = vsel %vm555, %v554, %v552
    %v557 = vadd.s32 %v543, 4294967264
    %v558 = vperm.slane %v514, %v557
    %vm559 = vcmask 326912
    %v560 = vsel %vm559, %v558, %v556
    %v561 = vadd.s32 %v543, 4294967256
    %v562 = vperm.slane %v515, %v561
    %vm563 = vcmask 392512
    %v564 = vsel %vm563, %v562, %v560
    %v565 = vadd.s32 %v543, 4294967248
    %v566 = vperm.slane %v516, %v565
    %vm567 = vcmask 458112
    %v568 = vsel %vm567, %v566, %v564
    %v569 = vadd.s32 %v543, 4294967240
    %v570 = vperm.slane %v517, %v569
    %vm571 = vcmask 523712
    %v572 = vsel %vm571, %v570, %v568
    %v573 = vadd.s32 %v543, 4294967232
    %v574 = vperm.slane %v518, %v573
    %vm575 = vcmask 589312
    %v576 = vsel %vm575, %v574, %v572
    %v577 = vadd.s32 %v543, 4294967224
    %v578 = vperm.slane %v519, %v577
    %vm579 = vcmask 654912
    %v580 = vsel %vm579, %v578, %v576
    %v581 = vadd.s32 %v543, 4294967216
    %v582 = vperm.slane %v520, %v581
    %vm583 = vcmask 720512
    %v584 = vsel %vm583, %v582, %v580
    %v585 = vadd.s32 %v543, 4294967208
    %v586 = vperm.slane %v521, %v585
    %vm587 = vcmask 786112
    %v588 = vsel %vm587, %v586, %v584
    %v589 = vadd.s32 %v543, 4294967200
    %v590 = vperm.slane %v522, %v589
    %vm591 = vcmask 851712
    %v592 = vsel %vm591, %v590, %v588
    %v593 = vadd.s32 %v543, 4294967192
    %v594 = vperm.slane %v523, %v593
    %vm595 = vcmask 917312
    %v596 = vsel %vm595, %v594, %v592
    %v597 = vadd.s32 %v543, 4294967184
    %v598 = vperm.slane %v524, %v597
    %vm599 = vcmask 982912
    %v600 = vsel %vm599, %v598, %v596
    %v601 = vadd.s32 %v543, 4294967176
    %v602 = vperm.slane %v525, %v601
    %vm603 = vcmask 1048512
    %v604 = vsel %vm603, %v602, %v600
    %606 = vst [vmem:[#allocation8] sm:$0x1] %v604
    // Predicated region
    $region30: #{tpu_custom_call.1} parent=1 // pred_check
      _
    $region31: #{tpu_custom_call.1} parent=1 // pred_check_branch
      %608 = sbr.rel (0) target = $region33
    $region32: #{tpu_custom_call.1} parent=1 // pred_region
      %610 = vsyncadd [#allocation5], 0
      %s612 = sshll.u32 [#allocation8], 4
      %s613 = int_to_ptr.vmem [resolvable:$true] %s612
      %s614 = sshll.u32 %s5, 4
      %s615 = int_to_ptr.hbm [resolvable:$true] %s614
      %617 = dma.vmem_to_hbm [thread:$0]  %s613, 16, %s615, [#allocation5]
    $region33: #{tpu_custom_call.1} parent=1 // pred_fallthru
      _
    // Predicated region
    $region34: #{tpu_custom_call.1} parent=1 // pred_check
      _
    $region35: #{tpu_custom_call.1} parent=1 // pred_check_branch
      %619 = sbr.rel (0) target = $region37
    $region36: #{tpu_custom_call.1} parent=1 // pred_region
      %621 = dma.done [#allocation5], 16
    $region37: #{tpu_custom_call.1} parent=1 // pred_fallthru
      _
    %622 = vsyncpa [#allocation4], 1
    %623 = vsyncpa [#allocation7], 1
    %624 = vsyncpa [#allocation5], 1

</llo_original>
